<compile_context>
chip_gen: v7x
topology: tpu7x:2x2x1
jax: 0.10.0
libtpu: 0.0.40
codegen_flags: <defaults>
</compile_context>

<pallas_src>
import functools

import jax
import jax.numpy as jnp
from jax.experimental import pallas as pl
from jax.experimental.pallas import tpu as pltpu


_LANE = 128                 # vreg lane width
_SUBLANE = 8                # vreg sublane count (f32)
_SMALL_C_MAX = 32           # <= this many classes -> transposed (C, N) layout
_SMALL_C_TILE_CAP = 65536   # max examples (lanes) per block, transposed layout
_LARGE_C_TILE_CAP = 8192    # max examples (rows)  per block, row-major layout


def _round_up(x, m):
    return (x + m - 1) // m * m


def _cdiv(a, b):
    return (a + b - 1) // b


def _vmem_budgets():
    """(per-buffer logits block budget bytes, vmem_limit_bytes), generation aware."""
    try:
        cap = int(pltpu.get_tpu_info().vmem_capacity_bytes)
    except Exception:
        cap = 64 * 1024 * 1024  # conservative fallback (v7x per-core VMEM)
    # Native-dtype logits block budget.  Leaves headroom for x2 double-buffering and
    # the several full-size f32 intermediates the kernel body materializes in VMEM.
    block_budget = max(512 * 1024, cap // 32)   # 4 MiB on 128 MiB parts, 2 MiB on v7x
    vmem_limit = cap // 2                       # 64 MiB on v5e/v6e, 32 MiB on v7x
    return block_budget, vmem_limit


def _pick_tile(n, bytes_per_item, align, cap, block_budget):
    """Largest tile (multiple of `align`, <= cap) whose native-dtype logits block fits
    `block_budget`; shrunk so the 1-D grid has >= 4 balanced steps when there is
    enough work (keeps both v7x TensorCores busy and the DMA pipeline warm)."""
    n_ceil = _round_up(max(n, 1), align)
    by_budget = (block_budget // max(bytes_per_item, 1)) // align * align
    tile = min(cap, max(align, by_budget), n_ceil)
    target_steps = 4
    if _cdiv(n_ceil, tile) < target_steps and n_ceil >= target_steps * align:
        tile = (n_ceil // target_steps) // align * align
    # Avoid a block taller than the whole array when possible (prefer a ragged tail).
    if tile > n >= align:
        tile = n // align * align
    return max(align, tile // align * align)


def _modulating_factor(one_minus_pt, gamma):
    """(1 - pt) ** gamma, with gamma specialized at trace time (Python float)."""
    if gamma == 0.0:
        return jnp.ones_like(one_minus_pt)
    if gamma == 1.0:
        return one_minus_pt
    if gamma == 2.0:
        return one_minus_pt * one_minus_pt
    if gamma == 3.0:
        return one_minus_pt * one_minus_pt * one_minus_pt
    # generic path: one_minus_pt is clamped >= 0; guard x == 0 so the
    # exp(gamma * log(x)) lowering never produces NaN.
    return jnp.where(one_minus_pt > 0.0,
                     jnp.power(one_minus_pt, jnp.float32(gamma)),
                     jnp.zeros_like(one_minus_pt))


def _focal_core(logits_f32, cls_eq_tgt, tgt, in_bounds, *, alpha, gamma,
                ignore_index, axis):
    """Shared math: reduce classes over `axis`; `tgt` broadcasts against the per-row shape."""
    m = jnp.max(logits_f32, axis=axis, keepdims=True)
    shifted = logits_f32 - m
    sumexp = jnp.sum(jnp.exp(shifted), axis=axis, keepdims=True)
    shifted_t = jnp.sum(jnp.where(cls_eq_tgt, shifted, 0.0), axis=axis, keepdims=True)
    ce = jnp.log(sumexp) - shifted_t              # = logsumexp(logits) - logits[target]
    pt = jnp.exp(-ce)                             # softmax prob of the true class
    one_minus_pt = jnp.maximum(1.0 - pt, 0.0)     # clamp rounding overshoot
    loss = ce * _modulating_factor(one_minus_pt, gamma)
    if alpha >= 0:
        alpha_t = jnp.where(tgt == 0, jnp.float32(alpha), jnp.float32(1.0 - alpha))
        loss = alpha_t * loss
    valid = tgt != ignore_index
    if in_bounds is not None:
        valid = jnp.logical_and(valid, in_bounds)
    return jnp.where(valid, loss, 0.0)


def _kernel_classes_on_sublanes(logits_ref, targets_ref, loss_ref, *,
                                alpha, gamma, ignore_index):
    # logits: (C, T)  classes on sublanes, examples lane-dense; targets/loss: (1, T).
    # Padded columns carry target == ignore_index, so no extra bounds mask is needed.
    logits = logits_ref[...].astype(jnp.float32)
    tgt = targets_ref[...]
    c, t = logits.shape
    cls = jax.lax.broadcasted_iota(jnp.int32, (c, 1), 0)
    loss = _focal_core(logits, cls == tgt, tgt, None,
                       alpha=alpha, gamma=gamma, ignore_index=ignore_index, axis=0)
    loss_ref[...] = loss.astype(loss_ref.dtype)


def _kernel_classes_on_lanes(logits_ref, targets_ref, loss_ref, *,
                             n, alpha, gamma, ignore_index):
    # logits: (T, C)  classes on lanes; targets/loss: (T, 1).
    # The last grid block may run past row n (no wrapper padding): OOB output writes
    # are dropped by Pallas, and the global-row mask keeps the math well-defined.
    logits = logits_ref[...].astype(jnp.float32)
    tgt = targets_ref[...]
    t, c = logits.shape
    cls = jax.lax.broadcasted_iota(jnp.int32, (1, c), 1)
    row = jax.lax.broadcasted_iota(jnp.int32, (t, 1), 0) + pl.program_id(0) * t
    loss = _focal_core(logits, cls == tgt, tgt, row < n,
                       alpha=alpha, gamma=gamma, ignore_index=ignore_index, axis=1)
    loss_ref[...] = loss.astype(loss_ref.dtype)


def softmax_focal_loss(logits, targets, *, alpha=-1.0, gamma=2.0,
                       ignore_index=-100, reduction="none"):
    """logits: (N, C) float (any float dtype); targets: (N,) int. Returns loss per reduction."""
    n, c = logits.shape
    targets_i32 = targets.astype(jnp.int32)
    alpha = float(alpha)
    gamma = float(gamma)
    ignore_index = int(ignore_index)
    itemsize = jnp.dtype(logits.dtype).itemsize

    block_budget, vmem_limit = _vmem_budgets()
    compiler_params = pltpu.CompilerParams(
        dimension_semantics=("parallel",),
        vmem_limit_bytes=vmem_limit,
    )

    if c <= _SMALL_C_MAX:
        # --- tiny C: transposed layout, examples lane-dense (full lane utilization,
        #     large contiguous DMA granules, lane-dense (1, tile) output stores). ---
        tile = _pick_tile(n, bytes_per_item=c * itemsize, align=_LANE,
                          cap=_SMALL_C_TILE_CAP, block_budget=block_budget)
        n_pad = _round_up(n, tile)
        # TODO(synk): this transpose is one extra HBM read+write of the logits; producing
        # a (C, N) layout directly from the upstream head would remove it entirely.
        logits_t = jnp.pad(logits, ((0, n_pad - n), (0, 0))).T                    # (C, n_pad), native dtype
        tgt_row = jnp.pad(targets_i32, (0, n_pad - n),
                          constant_values=ignore_index).reshape(1, n_pad)         # (1, n_pad)
        kernel = functools.partial(_kernel_classes_on_sublanes,
                                   alpha=alpha, gamma=gamma, ignore_index=ignore_index)
        out = pl.pallas_call(
            kernel,
            out_shape=jax.ShapeDtypeStruct((1, n_pad), jnp.float32),
            grid_spec=pltpu.PrefetchScalarGridSpec(
                num_scalar_prefetch=0,
                grid=(n_pad // tile,),
                in_specs=[
                    pl.BlockSpec((c, tile), lambda i: (0, i)),
                    pl.BlockSpec((1, tile), lambda i: (0, i)),
                ],
                out_specs=pl.BlockSpec((1, tile), lambda i: (0, i)),
            ),
            compiler_params=compiler_params,
        )(logits_t, tgt_row)
        per_row = out.reshape(n_pad)[:n]
    else:
        # --- C > 32: row-major layout, classes already lane-dense.  No wrapper pad /
        #     transpose / upcast: the kernel reads the original buffer directly. ---
        row_align = _SUBLANE * max(1, 4 // itemsize)   # 8 rows for f32, 16 for bf16/f16
        tile = _pick_tile(n, bytes_per_item=c * itemsize, align=row_align,
                          cap=_LARGE_C_TILE_CAP, block_budget=block_budget)
        kernel = functools.partial(_kernel_classes_on_lanes, n=n,
                                   alpha=alpha, gamma=gamma, ignore_index=ignore_index)
        tgt_col = targets_i32.reshape(n, 1)                                       # free reshape
        # TODO(synk): the (tile, 1) output uses masked partial stores; a lane-dense
        # relayout would remove them but the output is <1% of the HBM traffic here.
        out = pl.pallas_call(
            kernel,
            out_shape=jax.ShapeDtypeStruct((n, 1), jnp.float32),
            grid_spec=pltpu.PrefetchScalarGridSpec(
                num_scalar_prefetch=0,
                grid=(_cdiv(n, tile),),
                in_specs=[
                    pl.BlockSpec((tile, c), lambda i: (i, 0)),
                    pl.BlockSpec((tile, 1), lambda i: (i, 0)),
                ],
                out_specs=pl.BlockSpec((tile, 1), lambda i: (i, 0)),
            ),
            compiler_params=compiler_params,
        )(logits, tgt_col)
        per_row = out.reshape(n)

    valid = targets_i32 != ignore_index
    if reduction == "mean":
        cnt = jnp.maximum(jnp.sum(valid.astype(jnp.float32)), 1.0)
        return jnp.sum(per_row) / cnt
    if reduction == "sum":
        return jnp.sum(per_row)
    # TODO(synk): PyTorch 'none' returns only the gathered valid rows (dynamic shape);
    # here the full-length per-row loss is returned with ignored rows masked to 0.
    return per_row


def _reference(logits, targets, alpha, gamma, ignore_index, reduction):
    """Plain-JAX reference (same masking convention) for a sanity check."""
    logits = logits.astype(jnp.float32)
    valid = targets != ignore_index
    tgt = jnp.where(valid, targets, 0)
    logp = jax.nn.log_softmax(logits, axis=1)
    p = jax.nn.softmax(logits, axis=1)
    onehot = jax.nn.one_hot(tgt, logits.shape[1], dtype=logits.dtype)
    ce = -jnp.sum(logp * onehot, axis=1)
    pt = jnp.sum(p * onehot, axis=1)
    loss = ce * (1.0 - pt) ** gamma
    if alpha >= 0:
        alpha_t = jnp.where(tgt == 0, alpha, 1.0 - alpha)
        loss = alpha_t * loss
    loss = jnp.where(valid, loss, 0.0)
    if reduction == "mean":
        return jnp.sum(loss) / jnp.maximum(jnp.sum(valid.astype(loss.dtype)), 1.0)
    if reduction == "sum":
        return jnp.sum(loss)
    return loss


if __name__ == "__main__":
    key = jax.random.PRNGKey(0)
    k1, k2, k3, k4, k5, k6 = jax.random.split(key, 6)

    # --- tiny-C path (transposed / lane-dense layout), default module config ---
    N, C = 16, 8
    logits = jax.random.normal(k1, (N, C), dtype=jnp.float32)
    targets = jax.random.randint(k2, (N,), 0, C, dtype=jnp.int32)
    targets = targets.at[3].set(-100)  # one ignored example
    out = jax.block_until_ready(
        softmax_focal_loss(logits, targets, alpha=-1.0, gamma=2.0,
                           ignore_index=-100, reduction="none"))
    ref = _reference(logits, targets, -1.0, 2.0, -100, "none")
    assert jnp.allclose(out, ref, atol=1e-5, rtol=1e-5), (out, ref)

    # alpha-weighting (binary targets) + 'mean' reduction
    bin_tgt = (targets % 2).astype(jnp.int32)
    out_mean = jax.block_until_ready(
        softmax_focal_loss(logits, bin_tgt, alpha=0.25, gamma=2.0, reduction="mean"))
    ref_mean = _reference(logits, bin_tgt, 0.25, 2.0, -100, "mean")
    assert jnp.allclose(out_mean, ref_mean, atol=1e-5, rtol=1e-5)

    # --- row-major path with C <= 128, native bf16 input, ragged row tail ---
    N1, C1 = 40, 96
    logits1 = jax.random.normal(k3, (N1, C1), dtype=jnp.float32).astype(jnp.bfloat16)
    targets1 = jax.random.randint(k4, (N1,), 0, C1, dtype=jnp.int32)
    targets1 = targets1.at[7].set(-100)
    out1 = jax.block_until_ready(
        softmax_focal_loss(logits1, targets1, alpha=-1.0, gamma=2.0, reduction="none"))
    ref1 = _reference(logits1, targets1, -1.0, 2.0, -100, "none")
    assert jnp.allclose(out1, ref1, atol=1e-4, rtol=1e-4), (out1, ref1)

    # --- large-C path, multi-block grid with OOB tail masking, generic gamma + 'sum' ---
    N2, C2 = 28, 256
    logits2 = jax.random.normal(k5, (N2, C2), dtype=jnp.float32)
    targets2 = jax.random.randint(k6, (N2,), 0, C2, dtype=jnp.int32)
    targets2 = targets2.at[5].set(-100)
    out_sum = jax.block_until_ready(
        softmax_focal_loss(logits2, targets2, alpha=-1.0, gamma=1.5, reduction="sum"))
    ref_sum = _reference(logits2, targets2, -1.0, 1.5, -100, "sum")
    assert jnp.allclose(out_sum, ref_sum, atol=1e-4, rtol=1e-5), (out_sum, ref_sum)

    print("KERNEL_OK")
</pallas_src>

<mosaic_0001>
module attributes {stable_mosaic.version = 11 : i64} {
  func.func @_kernel_classes_on_sublanes(%arg0: i32, %arg1: memref<8x128xf32, #tpu.memory_space<vmem>>, %arg2: memref<1x128xi32, #tpu.memory_space<vmem>>, %arg3: memref<1x128xf32, #tpu.memory_space<vmem>>) attributes {dimension_semantics = [#tpu.dimension_semantics<parallel>], iteration_bounds = array<i64: 1>, scalar_prefetch = 0 : i64, scratch_operands = 0 : i64, tpu.core_type = #tpu.core_type<tc>, window_params = [{transform_indices = @transform_0, window_bounds = array<i64: 8, 128>}, {transform_indices = @transform_1, window_bounds = array<i64: 1, 128>}, {transform_indices = @transform_2, window_bounds = array<i64: 1, 128>}]} {
    %c0 = arith.constant 0 : index
    %c0_0 = arith.constant 0 : index
    %0 = vector.load %arg1[%c0, %c0_0] : memref<8x128xf32, #tpu.memory_space<vmem>>, vector<8x128xf32>
    %c0_1 = arith.constant 0 : index
    %c0_2 = arith.constant 0 : index
    %1 = vector.load %arg2[%c0_1, %c0_2] : memref<1x128xi32, #tpu.memory_space<vmem>>, vector<1x128xi32>
    %2 = tpu.iota {dimensions = array<i32: 0>} : vector<8x1xi32>
    %3 = vector.broadcast %2 : vector<8x1xi32> to vector<8x128xi32>
    %4 = vector.broadcast %1 : vector<1x128xi32> to vector<8x128xi32>
    %5 = arith.cmpi eq, %3, %4 : vector<8x128xi32>
    %cst = arith.constant dense<0xFF800000> : vector<128xf32>
    %6 = vector.multi_reduction <maximumf>, %0, %cst [0] : vector<8x128xf32> to vector<128xf32>
    %7 = vector.shape_cast %6 : vector<128xf32> to vector<1x128xf32>
    %8 = vector.broadcast %7 : vector<1x128xf32> to vector<8x128xf32>
    %9 = arith.subf %0, %8 : vector<8x128xf32>
    %10 = math.exp %9 : vector<8x128xf32>
    %cst_3 = arith.constant dense<0.000000e+00> : vector<128xf32>
    %11 = vector.multi_reduction <add>, %10, %cst_3 [0] : vector<8x128xf32> to vector<128xf32>
    %12 = vector.shape_cast %11 : vector<128xf32> to vector<1x128xf32>
    %cst_4 = arith.constant 0.000000e+00 : f32
    %13 = vector.broadcast %cst_4 : f32 to vector<8x128xf32>
    %14 = arith.select %5, %9, %13 : vector<8x128xi1>, vector<8x128xf32>
    %cst_5 = arith.constant dense<0.000000e+00> : vector<128xf32>
    %15 = vector.multi_reduction <add>, %14, %cst_5 [0] : vector<8x128xf32> to vector<128xf32>
    %16 = vector.shape_cast %15 : vector<128xf32> to vector<1x128xf32>
    %17 = math.log %12 : vector<1x128xf32>
    %18 = arith.subf %17, %16 : vector<1x128xf32>
    %cst_6 = arith.constant 0.000000e+00 : f32
    %19 = vector.broadcast %cst_6 : f32 to vector<1x128xf32>
    %20 = arith.subf %19, %18 : vector<1x128xf32>
    %21 = math.exp %20 : vector<1x128xf32>
    %cst_7 = arith.constant 1.000000e+00 : f32
    %22 = vector.broadcast %cst_7 : f32 to vector<1x128xf32>
    %23 = arith.subf %22, %21 : vector<1x128xf32>
    %cst_8 = arith.constant 0.000000e+00 : f32
    %24 = vector.broadcast %cst_8 : f32 to vector<1x128xf32>
    %25 = arith.maximumf %23, %24 : vector<1x128xf32>
    %26 = arith.mulf %25, %25 : vector<1x128xf32>
    %27 = arith.mulf %18, %26 : vector<1x128xf32>
    %c-100_i32 = arith.constant -100 : i32
    %28 = vector.broadcast %c-100_i32 : i32 to vector<1x128xi32>
    %29 = arith.cmpi ne, %1, %28 : vector<1x128xi32>
    %cst_9 = arith.constant 0.000000e+00 : f32
    %30 = vector.broadcast %cst_9 : f32 to vector<1x128xf32>
    %31 = arith.select %29, %27, %30 : vector<1x128xi1>, vector<1x128xf32>
    %c0_10 = arith.constant 0 : index
    %c0_11 = arith.constant 0 : index
    %32 = vector.load %arg3[%c0_10, %c0_11] : memref<1x128xf32, #tpu.memory_space<vmem>>, vector<1x128xf32>
    tpu.vector_store %arg3[%c0_10, %c0_11], %31 {strides = array<i32>} : memref<1x128xf32, #tpu.memory_space<vmem>>, vector<1x128xf32>,
    return
  }
  func.func @transform_0(%arg0: i32) -> (i32, i32) {
    %c0_i32 = arith.constant 0 : i32
    %c0_i32_0 = arith.constant 0 : i32
    return %c0_i32, %arg0 : i32, i32
  }
  func.func @transform_1(%arg0: i32) -> (i32, i32) {
    %c0_i32 = arith.constant 0 : i32
    %c0_i32_0 = arith.constant 0 : i32
    return %c0_i32, %arg0 : i32, i32
  }
  func.func @transform_2(%arg0: i32) -> (i32, i32) {
    %c0_i32 = arith.constant 0 : i32
    %c0_i32_0 = arith.constant 0 : i32
    return %c0_i32, %arg0 : i32, i32
  }
}

</mosaic_0001>

<llo_original>
// kernel: tpu_custom_call.1
$region0: #{tpu_custom_call.1}
  #allocation0 [shape = 'u32[]', space=smem, size = 0x4, offset = 0x4, fixed_abs, tag = 'smem constant byte address 0x4 - core index']
  #allocation1 [shape = 'u32[144,128]{1,0:T(1,128)}', space=vmem, size = 0x12000, scoped, tag = 'internal scratch']
  %s0 = inlined_call_operand.hbm [shape: f32[8,128], index: 0, kind: input, shape index: {}]
  %s1 = inlined_call_operand.vmem [shape: s32[1,128], index: 1, kind: input, shape index: {}]
  %s2 = inlined_call_operand.hbm [shape: f32[1,128], index: 2, kind: output, shape index: {}]
  %s3 = sld [smem:[#allocation0]]
  $region22: #{tpu_custom_call.1} parent=0
    _
  %s5 = ssub.s32 1, %s3
  %s6 = scalar_select 0, %s5, %s3
  $region1: #{tpu_custom_call.1} parent=0
    #allocation2 [shape = 'u8[4096]{0}', space=vmem, size = 0x1000, scoped, tag = 'input window, operand 0, single buffered']
    #allocation3 [shape = 's32[1]{0}', space=sflag, size = 0x4, scoped, tag = 'scoped memory for tpu_custom_call.1']
    #allocation4 [shape = 's32[1]{0}', space=sflag, size = 0x4, scoped, tag = 'scoped memory for tpu_custom_call.1']
    #allocation5 [shape = 'u8[512]{0}', space=vmem, size = 0x400, scoped, tag = 'output window, operand 0, single buffered']
    %7 = vsyncpa [#allocation3], 0
    %8 = vsyncpa [#allocation4], 0
    // Predicated region
    $region2: #{tpu_custom_call.1} parent=1 // pred_check
      _
    $region3: #{tpu_custom_call.1} parent=1 // pred_check_branch
      %10 = sbr.rel (0) target = $region5
    $region4: #{tpu_custom_call.1} parent=1 // pred_region
      %s12 = ssub.s32 128, 128
      %13 = vsyncadd [#allocation3], %s12
      %s15 = sshll.u32 [#allocation2], 4
      %s16 = int_to_ptr.vmem [resolvable:$true] %s15
      %18 = dma.hbm_to_vmem [thread:$0]  %s0, 128, %s16, [#allocation3]
    $region5: #{tpu_custom_call.1} parent=1 // pred_fallthru
      _
    // Predicated region
    $region6: #{tpu_custom_call.1} parent=1 // pred_check
      _
    $region7: #{tpu_custom_call.1} parent=1 // pred_check_branch
      %20 = sbr.rel (0) target = $region9
    $region8: #{tpu_custom_call.1} parent=1 // pred_region
      _
    $region9: #{tpu_custom_call.1} parent=1 // pred_fallthru
      _
    // Predicated region
    $region10: #{tpu_custom_call.1} parent=1 // pred_check
      _
    $region11: #{tpu_custom_call.1} parent=1 // pred_check_branch
      %22 = sbr.rel (0) target = $region13
    $region12: #{tpu_custom_call.1} parent=1 // pred_region
      %23 = dma.done [#allocation3], 128
    $region13: #{tpu_custom_call.1} parent=1 // pred_fallthru
      _
    %v24 = vld [vmem:[#allocation2] sm:$0xff]
    %v25 = vld [vmem:[%s1] sm:$0x1]
    %v26 = vlaneseq
    %v27 = vshrl.u32 %v26, 7
    %v28 = vlaneseq
    %v29 = vshrl.u32 %v28, 7
    %v30 = vsub.s32 0, %v29
    %v31 = vrot.slane %v25, %v30
    %vm32 = vcmp.eq.s32.totalorder %v27, %v31
    %v33 = vrot.slane %v24, 4
    %v34 = vmax.f32 %v24, %v33
    %v35 = vrot.slane %v34, 2
    %v36 = vmax.f32 %v34, %v35
    %v37 = vrot.slane %v36, 1
    %v38 = vmax.f32 %v36, %v37
    %v39 = vsub.f32 %v24, %v38
    %v40 = vmul.f32 %v39, 1.442695
    %v41 = vpow.pop %v40
    %v42 = vrot.slane %v41, 4
    %v43 = vadd.f32 %v41, %v42
    %v44 = vrot.slane %v43, 2
    %v45 = vadd.f32 %v43, %v44
    %v46 = vrot.slane %v45, 1
    %v47 = vadd.f32 %v45, %v46
    %v48 = vsel %vm32, %v39, 0.0
    %v49 = vrot.slane %v48, 4
    %v50 = vadd.f32 %v48, %v49
    %v51 = vrot.slane %v50, 2
    %v52 = vadd.f32 %v50, %v51
    %v53 = vrot.slane %v52, 1
    %v54 = vadd.f32 %v52, %v53
    %v55 = vlog2.pop %v47
    %v56 = vmul.f32 %v55, 0.6931472
    %v57 = vsub.f32 %v56, %v54
    %v58 = vsub.f32 0.0, %v57
    %v59 = vmul.f32 %v58, 1.442695
    %v60 = vpow.pop %v59
    %v61 = vsub.f32 1.0, %v60
    %v62 = vmax.f32 %v61, 0.0
    %v63 = vmul.f32 %v62, %v62
    %v64 = vmul.f32 %v57, %v63
    %vm65 = vcmp.ne.s32.totalorder %v25, 4294967196
    %v66 = vsel %vm65, %v64, 0.0
    %67 = vst [vmem:[#allocation5] sm:$0x1] %v66
    // Predicated region
    $region14: #{tpu_custom_call.1} parent=1 // pred_check
      _
    $region15: #{tpu_custom_call.1} parent=1 // pred_check_branch
      %69 = sbr.rel (0) target = $region17
    $region16: #{tpu_custom_call.1} parent=1 // pred_region
      %s71 = ssub.s32 16, 16
      %72 = vsyncadd [#allocation4], %s71
      %s74 = sshll.u32 [#allocation5], 4
      %s75 = int_to_ptr.vmem [resolvable:$true] %s74
      %77 = dma.vmem_to_hbm [thread:$0]  %s75, 16, %s2, [#allocation4]
    $region17: #{tpu_custom_call.1} parent=1 // pred_fallthru
      _
    // Predicated region
    $region18: #{tpu_custom_call.1} parent=1 // pred_check
      _
    $region19: #{tpu_custom_call.1} parent=1 // pred_check_branch
      %79 = sbr.rel (0) target = $region21
    $region20: #{tpu_custom_call.1} parent=1 // pred_region
      %80 = dma.done [#allocation4], 16
    $region21: #{tpu_custom_call.1} parent=1 // pred_fallthru
      _
    %81 = vsyncpa [#allocation3], 1
    %82 = vsyncpa [#allocation4], 1

</llo_original>
